<compile_context>
chip_gen: v5e
topology: v5e:2x2
jax: 0.10.0
libtpu: 0.0.40
codegen_flags: <defaults>
</compile_context>

<pallas_src>
import jax
import jax.numpy as jnp
from jax.experimental import pallas as pl
from jax.experimental.pallas import tpu as pltpu


def conv_relu_ln_kernel(x_ref, w_ref, p_ref, o_ref):
    # x_ref: (TB, C_in, TN)   input slab (NCL orientation, lane-dense N)
    # w_ref: (C_out, C_in)    conv1d weight (kernel_size=1, squeezed), maybe bf16
    # p_ref: (C_out, 3)       f32 columns: [bias | gamma | beta]
    # o_ref: (TB, C_out, TN)
    w = w_ref[...]
    p = p_ref[...]
    bias = p[:, 0:1]     # (C_out, 1) f32
    gamma = p[:, 1:2]
    beta = p[:, 2:3]

    c_out = o_ref.shape[1]          # true channel count (blocks are unpadded in C)
    inv_c = 1.0 / c_out
    eps = 1e-5                      # torch nn.LayerNorm default

    # TB is small and static -> unrolled Python loop over folded batches.
    for b in range(x_ref.shape[0]):
        xb = x_ref[b]                                    # (C_in, TN)
        if xb.dtype != w.dtype:
            xb = xb.astype(w.dtype)                      # e.g. f32 -> bf16 (v5e path)
        # Pointwise conv == channel matmul on the MXU, f32 accumulation.
        y = jnp.dot(w, xb, preferred_element_type=jnp.float32)   # (C_out, TN)
        y = jnp.maximum(y + bias, 0.0)                            # bias + ReLU

        # One-pass LayerNorm stats over channels (axis 0, per sequence position).
        mean = jnp.sum(y, axis=0, keepdims=True) * inv_c          # (1, TN)
        ex2 = jnp.sum(y * y, axis=0, keepdims=True) * inv_c
        var = jnp.maximum(ex2 - mean * mean, 0.0)                 # biased variance
        inv_std = jax.lax.rsqrt(var + eps)

        o_ref[b] = ((y - mean) * (inv_std * gamma) + beta).astype(o_ref.dtype)


def _largest_divisor_le(n, cap):
    cap = max(1, min(n, cap))
    for d in range(cap, 0, -1):
        if n % d == 0:
            return d
    return 1


def _vmem_budget_bytes():
    # v7x has 64 MiB VMEM per TensorCore; v5e/v6e have 128 MiB.
    try:
        kind = jax.devices()[0].device_kind.lower()
    except Exception:
        kind = ""
    if "v7" in kind:
        return 48 * 1024 * 1024
    return 96 * 1024 * 1024


def conv_relu_ln1d(x_ncl, weight, bias, gamma, beta, *,
                   tile_n=1024, tile_b=None, mxu_dtype=None):
    """x_ncl: [B, C_in, N] (PyTorch NCL layout). Returns [B, C_out, N]."""
    B, C_in, N = x_ncl.shape
    if weight.ndim == 3:                 # torch Conv1d weight is (C_out, C_in, 1)
        weight = weight[..., 0]
    C_out = weight.shape[0]

    if mxu_dtype is not None:
        weight = weight.astype(mxu_dtype)        # tiny; cast once in the wrapper

    # Merge bias/gamma/beta into one small f32 block: one DMA, one resident tile.
    params = jnp.stack([bias.astype(jnp.float32),
                        gamma.astype(jnp.float32),
                        beta.astype(jnp.float32)], axis=-1)       # (C_out, 3)

    x_item = jnp.dtype(x_ncl.dtype).itemsize
    o_item = x_item
    w_item = jnp.dtype(weight.dtype).itemsize

    # ---- N tile: fixed target (multiple of 128), or full N when N is small ----
    TN = min(tile_n, N)
    if TN < N:
        TN = max(128, (TN // 128) * 128)

    # ---- batch folding (step-overhead-bound small-channel regime) ----
    if tile_b is not None:
        TB = _largest_divisor_le(B, tile_b)
    elif max(C_in, C_out) <= 64:
        TB = _largest_divisor_le(B, 8)
    else:
        TB = 1

    # ---- fit the tile footprint into the per-generation VMEM budget ----
    budget = _vmem_budget_bytes()

    def footprint(tb, tn):
        x_bytes = tb * C_in * tn * x_item
        o_bytes = tb * C_out * tn * o_item
        temps = 3 * C_out * tn * 4          # f32 y + fused LN temporaries (per slice)
        return 2 * (x_bytes + o_bytes) + temps + C_out * C_in * w_item + C_out * 3 * 4

    while footprint(TB, TN) > budget:
        if TN > 128:
            TN = max(128, (TN // 2) // 128 * 128)
        elif TB > 1:
            TB = _largest_divisor_le(B, TB - 1)
        else:
            break

    # ---- make sure >= 2 grid steps when possible (feed both v7x TensorCores) ----
    while (B // TB) * pl.cdiv(N, TN) < 2:
        if TB > 1:
            TB = _largest_divisor_le(B, TB - 1)
        elif TN > 128 and TN == N:
            TN = max(128, ((pl.cdiv(N, 2) + 127) // 128) * 128)
        else:
            break

    grid = (B // TB, pl.cdiv(N, TN))

    cost = pl.CostEstimate(
        flops=2 * B * N * C_in * C_out,
        transcendentals=B * N,                      # one rsqrt per sequence position
        bytes_accessed=(B * N * (C_in * x_item + C_out * o_item)
                        + C_out * C_in * w_item + C_out * 3 * 4),
    )

    out = pl.pallas_call(
        conv_relu_ln_kernel,
        out_shape=jax.ShapeDtypeStruct((B, C_out, N), x_ncl.dtype),
        grid_spec=pltpu.PrefetchScalarGridSpec(
            num_scalar_prefetch=0,
            grid=grid,
            in_specs=[
                pl.BlockSpec((TB, C_in, TN), lambda bi, ni: (bi, 0, ni)),
                pl.BlockSpec((C_out, C_in), lambda bi, ni: (0, 0)),
                pl.BlockSpec((C_out, 3), lambda bi, ni: (0, 0)),
            ],
            out_specs=pl.BlockSpec((TB, C_out, TN), lambda bi, ni: (bi, 0, ni)),
        ),
        compiler_params=pltpu.CompilerParams(
            dimension_semantics=("parallel", "parallel"),
            vmem_limit_bytes=budget,
        ),
        cost_estimate=cost,
    )(x_ncl, weight, params)
    return out


def _reference(x, weight, bias, gamma, beta, *, precision=None):
    # Pure-JAX reference matching the PyTorch module's math path (NCL in/out).
    y = jnp.einsum("oc,bcn->bon", weight, x, precision=precision)
    y = y + bias[None, :, None]
    y = jnp.maximum(y, 0.0)
    mean = jnp.mean(y, axis=1, keepdims=True)
    var = jnp.mean((y - mean) ** 2, axis=1, keepdims=True)
    y = (y - mean) / jnp.sqrt(var + 1e-5)
    return y * gamma[None, :, None] + beta[None, :, None]


if __name__ == "__main__":
    key = jax.random.PRNGKey(0)
    kx, kw, kb, kg, kbe, kx2 = jax.random.split(key, 6)

    B, C_in, C_out, N = 2, 4, 8, 16
    x = jax.random.normal(kx, (B, C_in, N), jnp.float32)
    weight = jax.random.normal(kw, (C_out, C_in), jnp.float32) * 0.1
    bias = jax.random.normal(kb, (C_out,), jnp.float32) * 0.1
    gamma = 1.0 + 0.1 * jax.random.normal(kg, (C_out,), jnp.float32)
    beta = 0.1 * jax.random.normal(kbe, (C_out,), jnp.float32)

    # For tight comparisons, compare against a reference whose matmul operands
    # are identically bf16-truncated (same bits the MXU sees on the bf16 path).
    wq = weight.astype(jnp.bfloat16).astype(jnp.float32)
    hi = jax.lax.Precision.HIGHEST

    # Case 1: small shapes, bf16 MXU operands (v5e-friendly path).
    out = jax.block_until_ready(
        conv_relu_ln1d(x, weight, bias, gamma, beta, mxu_dtype=jnp.bfloat16))
    xq = x.astype(jnp.bfloat16).astype(jnp.float32)
    ref = _reference(xq, wq, bias, gamma, beta, precision=hi)
    assert out.shape == (B, C_out, N)
    assert jnp.allclose(out, ref, atol=1e-4, rtol=1e-4), \
        float(jnp.max(jnp.abs(out - ref)))

    # Case 2: padded last N tile (N=300 with TN=256) + batch folding (TB=3).
    B2, N2 = 3, 300
    x2 = jax.random.normal(kx2, (B2, C_in, N2), jnp.float32)
    out2 = jax.block_until_ready(
        conv_relu_ln1d(x2, weight, bias, gamma, beta,
                       tile_n=256, tile_b=3, mxu_dtype=jnp.bfloat16))
    x2q = x2.astype(jnp.bfloat16).astype(jnp.float32)
    ref2 = _reference(x2q, wq, bias, gamma, beta, precision=hi)
    assert out2.shape == (B2, C_out, N2)
    assert jnp.allclose(out2, ref2, atol=1e-4, rtol=1e-4), \
        float(jnp.max(jnp.abs(out2 - ref2)))

    # Case 3: native-f32 operands (default path). Loose tolerance: the MXU's
    # default precision for f32 operands may truncate toward bf16.
    out3 = jax.block_until_ready(conv_relu_ln1d(x, weight, bias, gamma, beta))
    ref3 = _reference(x, weight, bias, gamma, beta, precision=hi)
    assert out3.shape == (B, C_out, N)
    assert jnp.allclose(out3, ref3, atol=2e-2, rtol=2e-2), \
        float(jnp.max(jnp.abs(out3 - ref3)))

    print("KERNEL_OK")
</pallas_src>

<mosaic_0001>
module attributes {stable_mosaic.version = 11 : i64} {
  func.func @conv_relu_ln_kernel(%arg0: i32, %arg1: i32, %arg2: memref<1x4x16xf32, #tpu.memory_space<vmem>>, %arg3: memref<8x4xbf16, #tpu.memory_space<vmem>>, %arg4: memref<8x3xf32, #tpu.memory_space<vmem>>, %arg5: memref<1x8x16xf32, #tpu.memory_space<vmem>>) attributes {dimension_semantics = [#tpu.dimension_semantics<parallel>, #tpu.dimension_semantics<parallel>], iteration_bounds = array<i64: 2, 1>, scalar_prefetch = 0 : i64, scratch_operands = 0 : i64, tpu.core_type = #tpu.core_type<tc>, window_params = [{transform_indices = @transform_0, window_bounds = array<i64: 1, 4, 16>}, {pipeline_mode = #tpu.pipeline_mode<synchronous>, transform_indices = @transform_1, window_bounds = array<i64: 8, 4>}, {pipeline_mode = #tpu.pipeline_mode<synchronous>, transform_indices = @transform_2, window_bounds = array<i64: 8, 3>}, {transform_indices = @transform_3, window_bounds = array<i64: 1, 8, 16>}]} {
    %c0 = arith.constant 0 : index
    %c0_0 = arith.constant 0 : index
    %0 = vector.load %arg3[%c0, %c0_0] : memref<8x4xbf16, #tpu.memory_space<vmem>>, vector<8x4xbf16>
    %c0_1 = arith.constant 0 : index
    %c0_2 = arith.constant 0 : index
    %1 = vector.load %arg4[%c0_1, %c0_2] : memref<8x3xf32, #tpu.memory_space<vmem>>, vector<8x3xf32>
    %2 = vector.extract_strided_slice %1 {offsets = [0, 0], sizes = [8, 1], strides = [1, 1]} : vector<8x3xf32> to vector<8x1xf32>
    %3 = vector.extract_strided_slice %1 {offsets = [0, 1], sizes = [8, 1], strides = [1, 1]} : vector<8x3xf32> to vector<8x1xf32>
    %4 = vector.extract_strided_slice %1 {offsets = [0, 2], sizes = [8, 1], strides = [1, 1]} : vector<8x3xf32> to vector<8x1xf32>
    %c0_3 = arith.constant 0 : index
    %c0_4 = arith.constant 0 : index
    %c0_5 = arith.constant 0 : index
    %5 = vector.load %arg2[%c0_3, %c0_4, %c0_5] : memref<1x4x16xf32, #tpu.memory_space<vmem>>, vector<1x4x16xf32>
    %6 = vector.shape_cast %5 : vector<1x4x16xf32> to vector<4x16xf32>
    %7 = arith.truncf %6 : vector<4x16xf32> to vector<4x16xbf16>
    %cst = arith.constant dense<0.000000e+00> : vector<8x16xf32>
    %8 = tpu.matmul %0, %7, %cst {dimension_numbers = #tpu.dot_dimension_numbers<[1], [0], [0], [1], [0, 0, 1, 1], [], []>} : vector<8x4xbf16>, vector<4x16xbf16>, vector<8x16xf32> -> vector<8x16xf32>
    %9 = vector.broadcast %2 : vector<8x1xf32> to vector<8x16xf32>
    %10 = arith.addf %8, %9 : vector<8x16xf32>
    %cst_6 = arith.constant 0.000000e+00 : f32
    %11 = vector.broadcast %cst_6 : f32 to vector<8x16xf32>
    %12 = arith.maximumf %10, %11 : vector<8x16xf32>
    %cst_7 = arith.constant dense<0.000000e+00> : vector<16xf32>
    %13 = vector.multi_reduction <add>, %12, %cst_7 [0] : vector<8x16xf32> to vector<16xf32>
    %14 = vector.shape_cast %13 : vector<16xf32> to vector<1x16xf32>
    %cst_8 = arith.constant 1.250000e-01 : f32
    %15 = vector.broadcast %cst_8 : f32 to vector<1x16xf32>
    %16 = arith.mulf %14, %15 : vector<1x16xf32>
    %17 = arith.mulf %12, %12 : vector<8x16xf32>
    %cst_9 = arith.constant dense<0.000000e+00> : vector<16xf32>
    %18 = vector.multi_reduction <add>, %17, %cst_9 [0] : vector<8x16xf32> to vector<16xf32>
    %19 = vector.shape_cast %18 : vector<16xf32> to vector<1x16xf32>
    %cst_10 = arith.constant 1.250000e-01 : f32
    %20 = vector.broadcast %cst_10 : f32 to vector<1x16xf32>
    %21 = arith.mulf %19, %20 : vector<1x16xf32>
    %22 = arith.mulf %16, %16 : vector<1x16xf32>
    %23 = arith.subf %21, %22 : vector<1x16xf32>
    %cst_11 = arith.constant 0.000000e+00 : f32
    %24 = vector.broadcast %cst_11 : f32 to vector<1x16xf32>
    %25 = arith.maximumf %23, %24 : vector<1x16xf32>
    %cst_12 = arith.constant 9.99999974E-6 : f32
    %26 = vector.broadcast %cst_12 : f32 to vector<1x16xf32>
    %27 = arith.addf %25, %26 : vector<1x16xf32>
    %28 = math.rsqrt %27 : vector<1x16xf32>
    %29 = vector.broadcast %16 : vector<1x16xf32> to vector<8x16xf32>
    %30 = arith.subf %12, %29 : vector<8x16xf32>
    %31 = vector.broadcast %28 : vector<1x16xf32> to vector<8x16xf32>
    %32 = vector.broadcast %3 : vector<8x1xf32> to vector<8x16xf32>
    %33 = arith.mulf %31, %32 : vector<8x16xf32>
    %34 = arith.mulf %30, %33 : vector<8x16xf32>
    %35 = vector.broadcast %4 : vector<8x1xf32> to vector<8x16xf32>
    %36 = arith.addf %34, %35 : vector<8x16xf32>
    %c0_13 = arith.constant 0 : index
    %c0_14 = arith.constant 0 : index
    %c0_15 = arith.constant 0 : index
    %37 = vector.load %arg5[%c0_13, %c0_14, %c0_15] : memref<1x8x16xf32, #tpu.memory_space<vmem>>, vector<1x8x16xf32>
    %38 = vector.shape_cast %37 : vector<1x8x16xf32> to vector<8x16xf32>
    %39 = vector.shape_cast %36 : vector<8x16xf32> to vector<1x8x16xf32>
    tpu.vector_store %arg5[%c0_13, %c0_14, %c0_15], %39 {strides = array<i32>} : memref<1x8x16xf32, #tpu.memory_space<vmem>>, vector<1x8x16xf32>,
    return
  }
  func.func @transform_0(%arg0: i32, %arg1: i32) -> (i32, i32, i32) {
    %c0_i32 = arith.constant 0 : i32
    %c0_i32_0 = arith.constant 0 : i32
    return %arg0, %c0_i32, %arg1 : i32, i32, i32
  }
  func.func @transform_1(%arg0: i32, %arg1: i32) -> (i32, i32) {
    %c0_i32 = arith.constant 0 : i32
    %c0_i32_0 = arith.constant 0 : i32
    %c0_i32_1 = arith.constant 0 : i32
    return %c0_i32, %c0_i32_0 : i32, i32
  }
  func.func @transform_2(%arg0: i32, %arg1: i32) -> (i32, i32) {
    %c0_i32 = arith.constant 0 : i32
    %c0_i32_0 = arith.constant 0 : i32
    %c0_i32_1 = arith.constant 0 : i32
    return %c0_i32, %c0_i32_0 : i32, i32
  }
  func.func @transform_3(%arg0: i32, %arg1: i32) -> (i32, i32, i32) {
    %c0_i32 = arith.constant 0 : i32
    %c0_i32_0 = arith.constant 0 : i32
    return %arg0, %c0_i32, %arg1 : i32, i32, i32
  }
}

</mosaic_0001>

<llo_original>
// kernel: tpu_custom_call.1
$region0: #{tpu_custom_call.1}
  #allocation0 [shape = 'u32[]', space=smem, size = 0x4, offset = 0x4, fixed_abs, tag = 'smem constant byte address 0x4 - core index']
  #allocation1 [shape = 'u32[72,128]{1,0:T(1,128)}', space=vmem, size = 0x9000, scoped, tag = 'internal scratch']
  %s0 = inlined_call_operand.vmem [shape: f32[2,4,16], index: 0, kind: input, shape index: {}]
  %s1 = inlined_call_operand.vmem [shape: bf16[8,4], index: 1, kind: input, shape index: {}]
  %s2 = inlined_call_operand.vmem [shape: f32[8,3], index: 2, kind: input, shape index: {}]
  %s3 = inlined_call_operand.hbm [shape: f32[2,8,16], index: 3, kind: output, shape index: {}]
  %s4 = sld [smem:[#allocation0]]
  $region45: #{tpu_custom_call.1} parent=0
    _
  %s6 = ssub.s32 1, %s4
  %s7 = scalar_select 0, %s6, %s4
  $region1: #{tpu_custom_call.1} parent=0
    #allocation2 [shape = 'u8[8192]{0}', space=vmem, size = 0x2000, scoped, tag = 'output window, operand 0']
    #allocation3 [shape = 's32[2]{0}', space=sflag, size = 0x8, scoped, tag = 'scoped memory for tpu_custom_call.1']
    %8 = vsyncpa [#allocation3], 0
    %s9 = scalar_lea.sflag [#allocation3], 1
    %10 = vsyncpa %s9, 0
    loop: start=0, step=1, limit=4
    $region2: #{tpu_custom_call.1} parent=1 // loop_pre_header
      _
    $region3: #{tpu_custom_call.1} parent=1 // loop_header
      %s12 = sphi 0, %s16
      %p13 = scmp.ge.s32.totalorder %s12, 4
      %s19 = sphi 0, %s31
      %s20 = sphi 0, %s27
      %s21 = sphi 0, %s19
      %s22 = sphi 0, %s20
      %s23 = sphi 0, %s21
      %s24 = sphi 0, %s22
      %s36 = sphi 0, %s38
      %s39 = sphi 0, %s36
      %s40 = sphi 0, %s39
      %s56 = sphi 0, %s40
      %s60 = sphi 0, %s60
      %s62 = sphi 0, %s60
      %s63 = sphi 0, %s62
      %s77 = sphi 0, %s63
      %s81 = sphi 0, %s81
      %s83 = sphi 0, %s81
      %s84 = sphi 0, %s83
      %s98 = sphi 0, %s84
      %s106 = sphi 0, %s108
      %s109 = sphi 0, %s106
      %s110 = sphi 0, %s109
      %s126 = sphi 0, %s110
    $region4: #{tpu_custom_call.1} parent=1 // loop_header_branch
      %15 = sbr.rel (%p13) target = $region8
    $region5: #{tpu_custom_call.1} parent=1 // loop_body
      %s17 = ssub.s32 %s12, 1
      %s18 = ssub.s32 %s12, 2
      %s25 = sadd.s32 1, %s20
      %p26 = scmp.ge.s32.totalorder %s25, 1
      %s27 = scalar_select %p26, 0, %s25
      %s28 = sadd.s32 1, %s19
      %s29 = scalar_select %p26, %s28, %s19
      %p30 = scmp.ge.s32.totalorder %s29, 2
      %s31 = scalar_select %p30, 0, %s29
      %s32 = ssub.s32 %s19, %s31
      %s33 = ssub.s32 %s20, %s27
      %s34 = sor.u32 %s32, %s33
      %p35 = scmp.eq.s32.totalorder %s34, 0
      %s37 = sadd.s32 %s36, 1
      %s38 = scalar_select %p35, %s36, %s37
      %p41 = pneg %p35
      %p42 = scmp.eq.s32.totalorder %s12, 1
      %p43 = por %p41, %p42
      %p44 = scmp.ne.s32.totalorder %s36, %s39
      %p45 = scmp.eq.s32.totalorder %s12, 0
      %p46 = por %p44, %p45
      %p47 = scmp.ne.s32.totalorder %s36, %s39
      %p48 = scmp.eq.s32.totalorder %s17, 1
      %p49 = por %p47, %p48
      %p50 = scmp.ne.s32.totalorder %s39, %s40
      %p51 = scmp.eq.s32.totalorder %s17, 0
      %p52 = por %p50, %p51
      %p53 = scmp.ne.s32.totalorder %s39, %s40
      %p54 = scmp.eq.s32.totalorder %s18, 1
      %p55 = por %p53, %p54
      %p57 = scmp.ne.s32.totalorder %s40, %s56
      %p58 = scmp.eq.s32.totalorder %s18, 0
      %p59 = por %p57, %p58
      %s61 = sadd.s32 %s60, 1
      %p64 = scmp.eq.s32.totalorder %s12, 1
      %p65 = scmp.ne.s32.totalorder %s60, %s62
      %p66 = scmp.eq.s32.totalorder %s12, 0
      %p67 = por %p65, %p66
      %p68 = scmp.ne.s32.totalorder %s60, %s62
      %p69 = scmp.eq.s32.totalorder %s17, 1
      %p70 = por %p68, %p69
      %p71 = scmp.ne.s32.totalorder %s62, %s63
      %p72 = scmp.eq.s32.totalorder %s17, 0
      %p73 = por %p71, %p72
      %p74 = scmp.ne.s32.totalorder %s62, %s63
      %p75 = scmp.eq.s32.totalorder %s18, 1
      %p76 = por %p74, %p75
      %p78 = scmp.ne.s32.totalorder %s63, %s77
      %p79 = scmp.eq.s32.totalorder %s18, 0
      %p80 = por %p78, %p79
      %s82 = sadd.s32 %s81, 1
      %p85 = scmp.eq.s32.totalorder %s12, 1
      %p86 = scmp.ne.s32.totalorder %s81, %s83
      %p87 = scmp.eq.s32.totalorder %s12, 0
      %p88 = por %p86, %p87
      %p89 = scmp.ne.s32.totalorder %s81, %s83
      %p90 = scmp.eq.s32.totalorder %s17, 1
      %p91 = por %p89, %p90
      %p92 = scmp.ne.s32.totalorder %s83, %s84
      %p93 = scmp.eq.s32.totalorder %s17, 0
      %p94 = por %p92, %p93
      %p95 = scmp.ne.s32.totalorder %s83, %s84
      %p96 = scmp.eq.s32.totalorder %s18, 1
      %p97 = por %p95, %p96
      %p99 = scmp.ne.s32.totalorder %s84, %s98
      %p100 = scmp.eq.s32.totalorder %s18, 0
      %p101 = por %p99, %p100
      %s102 = ssub.s32 %s19, %s31
      %s103 = ssub.s32 %s20, %s27
      %s104 = sor.u32 %s102, %s103
      %p105 = scmp.eq.s32.totalorder %s104, 0
      %s107 = sadd.s32 %s106, 1
      %s108 = scalar_select %p105, %s106, %s107
      %p111 = pneg %p105
      %p112 = scmp.eq.s32.totalorder %s12, 1
      %p113 = por %p111, %p112
      %p114 = scmp.ne.s32.totalorder %s106, %s109
      %p115 = scmp.eq.s32.totalorder %s12, 0
      %p116 = por %p114, %p115
      %p117 = scmp.ne.s32.totalorder %s106, %s109
      %p118 = scmp.eq.s32.totalorder %s17, 1
      %p119 = por %p117, %p118
      %p120 = scmp.ne.s32.totalorder %s109, %s110
      %p121 = scmp.eq.s32.totalorder %s17, 0
      %p122 = por %p120, %p121
      %p123 = scmp.ne.s32.totalorder %s109, %s110
      %p124 = scmp.eq.s32.totalorder %s18, 1
      %p125 = por %p123, %p124
      %p127 = scmp.ne.s32.totalorder %s110, %s126
      %p128 = scmp.eq.s32.totalorder %s18, 0
      %p129 = por %p127, %p128
      %p130 = scmp.le.s32.totalorder 1, %s12
      %p131 = scmp.lt.s32.totalorder %s12, 3
      %p132 = pnand %p130, %p131
      %p133 = pneg %p132
      // Predicated region
      $region9: #{tpu_custom_call.1} parent=5 // pred_check
        _
      $region10: #{tpu_custom_call.1} parent=5 // pred_check_branch
        %135 = sbr.rel (%p132) target = $region12
      $region11: #{tpu_custom_call.1} parent=5 // pred_region
        %s136 = ssub.s32 %s12, 1
        // Predicated region
        $region13: #{tpu_custom_call.1} parent=11 // pred_check
          %p137 = pneg %p73
        $region14: #{tpu_custom_call.1} parent=11 // pred_check_branch
          %139 = sbr.rel (%p137) target = $region16
        $region15: #{tpu_custom_call.1} parent=11 // pred_region
          _
        $region16: #{tpu_custom_call.1} parent=11 // pred_fallthru
          _
        // Predicated region
        $region17: #{tpu_custom_call.1} parent=11 // pred_check
          %p140 = pneg %p94
        $region18: #{tpu_custom_call.1} parent=11 // pred_check_branch
          %142 = sbr.rel (%p140) target = $region20
        $region19: #{tpu_custom_call.1} parent=11 // pred_region
          _
        $region20: #{tpu_custom_call.1} parent=11 // pred_fallthru
          _
      $region12: #{tpu_custom_call.1} parent=5 // pred_fallthru
        _
      %p143 = scmp.lt.s32.totalorder %s12, 2
      // Predicated region
      $region21: #{tpu_custom_call.1} parent=5 // pred_check
        %p144 = pneg %p143
      $region22: #{tpu_custom_call.1} parent=5 // pred_check_branch
        %146 = sbr.rel (%p144) target = $region24
      $region23: #{tpu_custom_call.1} parent=5 // pred_region
        // Predicated region
        $region25: #{tpu_custom_call.1} parent=23 // pred_check
          %p147 = pneg %p46
        $region26: #{tpu_custom_call.1} parent=23 // pred_check_branch
          %149 = sbr.rel (%p147) target = $region28
        $region27: #{tpu_custom_call.1} parent=23 // pred_region
          %p150 = scmp.lt.s32.totalorder %s19, 1
          %s151 = scalar_select %p150, %s19, 1
          %p152 = scmp.lt.s32.totalorder %s20, 0
          %s153 = scalar_select %p152, %s20, 0
          %s154 = sadd.s32 %s153, %s151
          %s155 = smul.addr %s154, 4
          %s156 = scalar_lea.vmem %s0, %s155
        $region28: #{tpu_custom_call.1} parent=23 // pred_fallthru
          _
      $region24: #{tpu_custom_call.1} parent=5 // pred_fallthru
        _
      %p157 = scmp.le.s32.totalorder 1, %s12
      %p158 = scmp.lt.s32.totalorder %s12, 3
      %p159 = pnand %p157, %p158
      %p160 = pneg %p159
      // Predicated region
      $region29: #{tpu_custom_call.1} parent=5 // pred_check
        _
      $region30: #{tpu_custom_call.1} parent=5 // pred_check_branch
        %162 = sbr.rel (%p159) target = $region32
      $region31: #{tpu_custom_call.1} parent=5 // pred_region
        %s163 = ssub.s32 %s12, 1
        %p164 = scmp.lt.s32.totalorder %s21, 1
        %s165 = scalar_select %p164, %s21, 1
        %p166 = scmp.lt.s32.totalorder %s22, 0
        %s167 = scalar_select %p166, %s22, 0
        %s168 = sadd.s32 %s167, %s165
        %s169 = smul.addr %s168, 4
        %s170 = scalar_lea.vmem %s0, %s169
        %p171 = pneg %p52
        %p172 = pneg %p49
        %p173 = pneg %p73
        %p174 = pneg %p70
        %p175 = pneg %p94
        %p176 = pneg %p91
        %p177 = pneg %p122
        %p178 = pneg %p119
        %s179 = sand.u32 %s109, 1
        %s180 = scalar_lea.sflag [#allocation3], %s179
        %s181 = sand.u32 %s109, 1
        %s182 = smul.addr %s181, 8
        %s183 = scalar_lea.vmem [#allocation2], %s182
        %p184 = scmp.lt.s32.totalorder %s21, 1
        %s185 = scalar_select %p184, %s21, 1
        %p186 = scmp.lt.s32.totalorder %s22, 0
        %s187 = scalar_select %p186, %s22, 0
        %s188 = sadd.s32 %s187, %s185
        %s189 = smul.addr %s188, 4
        %s190 = scalar_lea.vmem %s0, %s189
        %v192 = vld [vmem:[%s1] sm:$0xf]
        %v193 = vld [vmem:[%s2] sm:$0xff]
        %v194 = vld [vmem:[%s190] sm:$0xf]
        %v195 = vpack.c.bf16 %v194, %v194
        %197 = vset.pattern.permute.xlu0 0
        %198 = vperm.xlu0 %197, %v193
        %v199 = vpop.permute.xlu0 %198
        %vm201 = vcmask 31744
        %v203 = vsel %vm201, %v192, 0
        %vm205 = vcmask 1041408
        %v207 = vsel %vm205, %v195, 0
        %209 = vmatpush.bf16.msra.mxu0 0
        %210 = vmatpush.bf16.msra.mxu0 0
        %211 = vmatpush.bf16.msra.mxu0 0
        %212 = vmatpush.bf16.msra.mxu0 0
        %213 = vmatpush.bf16.msra.mxu0 0
        %214 = vmatpush.bf16.msra.mxu0 0
        %215 = vmatpush.bf16.msra.mxu0 0
        %216 = vmatpush.bf16.msra.mxu0 %v207
        %217 = vmatmul.bf16.gmra.mxu0 %v203
        %v218 = vpop.f32.mrf.mxu0
        %v219 = vadd.f32 %v199, %v218
        %v220 = vpop.f32.mrf.mxu0
        %221 = vdwg.mxu0
        %v222 = vmax.f32 %v219, 0.0
        %vm223 = vcmask 130048
        %v224 = vsel %vm223, %v222, 0.0
        %v225 = vrot.slane %v224, 4
        %v226 = vadd.f32 %v224, %v225
        %v227 = vrot.slane %v226, 2
        %v228 = vadd.f32 %v226, %v227
        %v229 = vrot.slane %v228, 1
        %v230 = vadd.f32 %v228, %v229
        %v231 = vmul.f32 %v230, 0.125
        %v232 = vmul.f32 %v222, %v222
        %v233 = vsel %vm223, %v232, 0.0
        %v234 = vrot.slane %v233, 4
        %v235 = vadd.f32 %v233, %v234
        %v236 = vrot.slane %v235, 2
        %v237 = vadd.f32 %v235, %v236
        %v238 = vrot.slane %v237, 1
        %v239 = vadd.f32 %v237, %v238
        %v240 = vmul.f32 %v239, 0.125
        %v241 = vmul.f32 %v231, %v231
        %v242 = vsub.f32 %v240, %v241
        %v243 = vmax.f32 %v242, 0.0
        %v244 = vadd.f32 %v243, 1e-05
        %v245 = vrsqrt.pop %v244
        %v246 = vmul.f32 %v245, %v244
        %v247 = vmul.f32 %v246, %v245
        %v248 = vmul.f32 0.5, %v247
        %v249 = vsub.f32 1.5, %v248
        %v250 = vmul.f32 %v245, %v249
        %vm251 = vweird.f32 %v244
        %vm252 = vweird.f32 %v245
        %vm253 = vmor %vm251, %vm252
        %v254 = vsel %vm253, %v245, %v250
        %v255 = vsub.f32 %v222, %v231
        %256 = vset.pattern.permute.xlu0 1
        %257 = vperm.xlu0 %256, %v193
        %v258 = vpop.permute.xlu0 %257
        %v260 = vmul.f32 %v254, %v258
        %v261 = vmul.f32 %v255, %v260
        %262 = vset.pattern.permute.xlu0 2
        %263 = vperm.xlu0 %262, %v193
        %v264 = vpop.permute.xlu0 %263
        %v266 = vadd.f32 %v261, %v264
        %267 = vst.msk [vmem:[%s183] sm:$0xff] %vm223, %v266
        %s268 = sand.u32 %s109, 1
        %s269 = scalar_lea.sflag [#allocation3], %s268
        %s270 = sand.u32 %s109, 1
        %s271 = smul.addr %s270, 8
        %s272 = scalar_lea.vmem [#allocation2], %s271
        // Predicated region
        $region33: #{tpu_custom_call.1} parent=31 // pred_check
          %p273 = pneg %p119
        $region34: #{tpu_custom_call.1} parent=31 // pred_check_branch
          %275 = sbr.rel (%p273) target = $region36
        $region35: #{tpu_custom_call.1} parent=31 // pred_region
          %277 = vsyncadd %s269, 0
          %s278 = sadd.s32 %s22, %s21
          %s279 = smul.addr %s278, 8
          %s280 = scalar_lea.hbm %s3, %s279
          %s282 = sshll.u32 %s272, 4
          %s283 = int_to_ptr.vmem [resolvable:$true] %s282
          %s284 = sshll.u32 %s280, 4
          %s285 = int_to_ptr.hbm [resolvable:$true] %s284
          %287 = dma.vmem_to_hbm [thread:$0]  %s283, 128, %s285, %s269
        $region36: #{tpu_custom_call.1} parent=31 // pred_fallthru
          _
      $region32: #{tpu_custom_call.1} parent=5 // pred_fallthru
        _
      %p288 = scmp.le.s32.totalorder 2, %s12
      // Predicated region
      $region37: #{tpu_custom_call.1} parent=5 // pred_check
        %p289 = pneg %p288
      $region38: #{tpu_custom_call.1} parent=5 // pred_check_branch
        %291 = sbr.rel (%p289) target = $region40
      $region39: #{tpu_custom_call.1} parent=5 // pred_region
        %s292 = ssub.s32 %s12, 2
        // Predicated region
        $region41: #{tpu_custom_call.1} parent=39 // pred_check
          %p293 = pneg %p125
        $region42: #{tpu_custom_call.1} parent=39 // pred_check_branch
          %295 = sbr.rel (%p293) target = $region44
        $region43: #{tpu_custom_call.1} parent=39 // pred_region
          %s296 = sand.u32 %s110, 1
          %s297 = scalar_lea.sflag [#allocation3], %s296
          %s298 = sand.u32 %s110, 1
          %s299 = smul.addr %s298, 8
          %s300 = scalar_lea.vmem [#allocation2], %s299
          %302 = dma.done %s297, 128
        $region44: #{tpu_custom_call.1} parent=39 // pred_fallthru
          _
      $region40: #{tpu_custom_call.1} parent=5 // pred_fallthru
        _
    $region6: #{tpu_custom_call.1} parent=1 // loop_footer
      %s16 = sadd.s32 1, %s12
    $region7: #{tpu_custom_call.1} parent=1 // loop_footer_branch
      %11 = sbr.rel target = $region3
    $region8: #{tpu_custom_call.1} parent=1 // loop_exit
      _
    %303 = vsyncpa [#allocation3], 1
    %s304 = scalar_lea.sflag [#allocation3], 1
    %305 = vsyncpa %s304, 1

</llo_original>
